<compile_context>
chip_gen: v5e
topology: v5e:2x2
jax: 0.10.0
libtpu: 0.0.40
codegen_flags: <defaults>
</compile_context>

<pallas_src>
import functools

import jax
import jax.numpy as jnp
from jax.experimental import pallas as pl
from jax.experimental.pallas import tpu as pltpu

_MiB = 1024 * 1024


@functools.lru_cache(maxsize=1)
def _vmem_capacity_bytes():
    """Per-core VMEM capacity; conservative (v7x, 64 MiB) if the query fails."""
    try:
        return int(pltpu.get_tpu_info().vmem_capacity_bytes)
    except Exception:
        return 64 * _MiB


# ----------------------------------------------------------------------------
# Kernels
# ----------------------------------------------------------------------------
def _vocab_proj_kernel(x_ref, w_ref, b_ref, o_ref):
    # Single-K path (whole embed dim in one tile).
    # x_ref: (tm, E)  w_ref: (E, tn)  b_ref: (1, tn)  o_ref: (tm, tn)
    acc = jnp.dot(x_ref[...], w_ref[...], preferred_element_type=jnp.float32)
    o_ref[...] = (acc + b_ref[...].astype(jnp.float32)).astype(o_ref.dtype)


def _vocab_proj_kernel_ktiled(x_ref, w_ref, b_ref, o_ref, acc_ref):
    # K-tiled path for very large embed dims (f32 accumulator in VMEM).
    k = pl.program_id(2)

    @pl.when(k == 0)
    def _init():
        acc_ref[...] = jnp.zeros_like(acc_ref)

    acc_ref[...] += jnp.dot(x_ref[...], w_ref[...],
                            preferred_element_type=jnp.float32)

    @pl.when(k == pl.num_programs(2) - 1)
    def _finalize():
        o_ref[...] = (acc_ref[...]
                      + b_ref[...].astype(jnp.float32)).astype(o_ref.dtype)


# ----------------------------------------------------------------------------
# Tile selection
# ----------------------------------------------------------------------------
def _choose_tiles(M, E, V, x_bytes, w_bytes, out_bytes, vmem_budget):
    def fits(tm, tn, tk):
        need = (2 * tm * tk * x_bytes        # activations (double-buffered)
                + 2 * tk * tn * w_bytes      # weights     (double-buffered)
                + 2 * tm * tn * out_bytes    # output      (double-buffered)
                + 2 * tn * 4                 # bias tile
                + (tm * tn * 4 if tk < E else 0))  # f32 accumulator scratch
        return need <= vmem_budget

    # Token tile: full M when small (decode), 256-multiples for prefill.
    tm_cands = [M] if M <= 512 else [512, 256, 128, 64, 32, 16, 8]
    # Vocab tile: as big and lane-dense as fits; 256-multiples preferred.
    tn_cands = [t for t in (4096, 2048, 1024, 512, 256, 128) if t < V]
    if V <= 4096:
        tn_cands = [V] + tn_cands
    if not tn_cands:
        tn_cands = [V]
    # Contraction tile: whole E when possible; otherwise an exact divisor of E
    # (so no ragged-K garbage ever enters the accumulation).
    tk_cands = [E] + [t for t in (2048, 1024, 512, 256, 128)
                      if t < E and E % t == 0]

    for tk in tk_cands:
        for tn in tn_cands:
            for tm in tm_cands:
                if fits(tm, tn, tk):
                    return tm, tn, tk
    return tm_cands[-1], tn_cands[-1], tk_cands[-1]


# ----------------------------------------------------------------------------
# Public API
# ----------------------------------------------------------------------------
def prepare_lemma_decoder_params(weight, bias, *, weight_dtype=jnp.bfloat16):
    """One-time (weight-load) preparation, amortized over every decode step:
       * transpose [vocab, embed] -> [embed, vocab]  (natural MXU [K, N] layout)
       * cast once to the resident storage dtype (bf16 halves weight HBM reads)
    """
    w_t = jnp.asarray(weight).T.astype(weight_dtype)   # [E, V]
    b = jnp.asarray(bias).astype(jnp.float32)          # [V]
    return w_t, b


@functools.partial(jax.jit, static_argnames=("out_dtype",))
def lemma_decoder_forward(x, w_t, bias, *, out_dtype=jnp.float32):
    """
    Eval-mode LemmaDecoder.forward: logits = x @ W^T + b (dropout is identity).

    x:    [batch, seq_len, embed_dim]
    w_t:  [embed_dim, vocab_size]   (from prepare_lemma_decoder_params)
    bias: [vocab_size]
    returns logits [batch, seq_len, vocab_size] in out_dtype.
    """
    B, S, E = x.shape
    Ew, V = w_t.shape
    assert E == Ew, (E, Ew)
    M = B * S

    # Compute dtype follows the resident weight dtype (bf16 by default); the
    # activation cast is negligible next to the V*E weight stream.
    if x.dtype != w_t.dtype:
        x = x.astype(w_t.dtype)

    x2d = x.reshape(M, E)
    b2d = bias.astype(jnp.float32).reshape(1, V)

    x_bytes = x2d.dtype.itemsize
    w_bytes = w_t.dtype.itemsize
    out_bytes = jnp.dtype(out_dtype).itemsize

    cap = _vmem_capacity_bytes()
    # ~46 MiB on v7x (64 MiB VMEM), ~92 MiB on v5e/v6e (128 MiB VMEM).
    vmem_budget = min(int(cap * 0.72), 110 * _MiB)
    tm, tn, tk = _choose_tiles(M, E, V, x_bytes, w_bytes, out_bytes, vmem_budget)
    n_k = pl.cdiv(E, tk)

    vmem_needed = (2 * tm * tk * x_bytes + 2 * tk * tn * w_bytes
                   + 2 * tm * tn * out_bytes + 2 * tn * 4
                   + (tm * tn * 4 if n_k > 1 else 0))
    # Always set the scoped-VMEM limit explicitly (v5e's default is 16 MiB).
    vmem_limit = int(min(max(vmem_needed, vmem_budget) + 8 * _MiB,
                         int(cap * 0.9)))

    cost = pl.CostEstimate(
        flops=2 * M * E * V,
        transcendentals=0,
        bytes_accessed=(M * E * x_bytes + E * V * w_bytes + 4 * V
                        + M * V * out_bytes),
    )
    compiler_params = dict(vmem_limit_bytes=vmem_limit)

    if n_k == 1:
        # Vocab axis OUTER ("parallel": megacore shards the weight stream
        # disjointly), token axis INNER and sequential ("arbitrary") so each
        # weight tile is DMA'd once and reused across every token tile.
        grid = (pl.cdiv(V, tn), pl.cdiv(M, tm))
        out = pl.pallas_call(
            _vocab_proj_kernel,
            out_shape=jax.ShapeDtypeStruct((M, V), out_dtype),
            grid_spec=pltpu.PrefetchScalarGridSpec(
                num_scalar_prefetch=0,
                grid=grid,
                in_specs=[
                    pl.BlockSpec((tm, E), lambda j, i: (i, 0)),   # activations
                    pl.BlockSpec((E, tn), lambda j, i: (0, j)),   # weights [E,V]
                    pl.BlockSpec((1, tn), lambda j, i: (0, j)),   # bias
                ],
                out_specs=pl.BlockSpec((tm, tn), lambda j, i: (i, j)),
            ),
            compiler_params=pltpu.CompilerParams(
                dimension_semantics=("parallel", "arbitrary"),
                **compiler_params),
            cost_estimate=cost,
        )(x2d, w_t, b2d)
    else:
        # Very large embed dim: tile the contraction axis with an f32
        # accumulator instead of starving the MXU with tiny token tiles.
        grid = (pl.cdiv(V, tn), pl.cdiv(M, tm), n_k)
        out = pl.pallas_call(
            _vocab_proj_kernel_ktiled,
            out_shape=jax.ShapeDtypeStruct((M, V), out_dtype),
            grid_spec=pltpu.PrefetchScalarGridSpec(
                num_scalar_prefetch=0,
                grid=grid,
                in_specs=[
                    pl.BlockSpec((tm, tk), lambda j, i, k: (i, k)),
                    pl.BlockSpec((tk, tn), lambda j, i, k: (k, j)),
                    pl.BlockSpec((1, tn), lambda j, i, k: (0, j)),
                ],
                out_specs=pl.BlockSpec((tm, tn), lambda j, i, k: (i, j)),
                scratch_shapes=[pltpu.VMEM((tm, tn), jnp.float32)],
            ),
            compiler_params=pltpu.CompilerParams(
                dimension_semantics=("parallel", "arbitrary", "arbitrary"),
                **compiler_params),
            cost_estimate=cost,
        )(x2d, w_t, b2d)

    return out.reshape(B, S, V)


# ----------------------------------------------------------------------------
# Self-test
# ----------------------------------------------------------------------------
if __name__ == "__main__":
    # Small shapes consistent with the module's forward:
    # batch=2, seq_len=8, embed_dim=32, vocab_size=256.
    B, S, E, V = 2, 8, 32, 256

    key = jax.random.PRNGKey(0)
    kx, kw, kb = jax.random.split(key, 3)

    x = jax.random.normal(kx, (B, S, E), dtype=jnp.float32)
    bound = 1.0 / float(E) ** 0.5
    weight = jax.random.uniform(kw, (V, E), minval=-bound, maxval=bound,
                                dtype=jnp.float32)
    bias = jax.random.uniform(kb, (V,), minval=-bound, maxval=bound,
                              dtype=jnp.float32)

    # Pure-JAX reference (PyTorch nn.Linear semantics).
    ref = jnp.einsum("bse,ve->bsv", x, weight) + bias

    # f32 resident-weight path (tight tolerance).
    w_f32, b_f32 = prepare_lemma_decoder_params(weight, bias,
                                                weight_dtype=jnp.float32)
    logits = jax.block_until_ready(lemma_decoder_forward(x, w_f32, b_f32))
    assert logits.shape == (B, S, V), logits.shape
    assert jnp.allclose(logits, ref, atol=1e-4, rtol=1e-4)

    # Default bf16 resident-weight path (halves weight HBM traffic; f32 MXU
    # accumulation, f32 logits out).
    w_bf16, b_prep = prepare_lemma_decoder_params(weight, bias)
    logits_bf16 = jax.block_until_ready(lemma_decoder_forward(x, w_bf16, b_prep))
    assert logits_bf16.shape == (B, S, V), logits_bf16.shape
    assert jnp.allclose(logits_bf16, ref, atol=3e-2, rtol=3e-2)

    print("KERNEL_OK")
</pallas_src>

<mosaic_0001>
module attributes {stable_mosaic.version = 11 : i64} {
  func.func @_vocab_proj_kernel(%arg0: i32, %arg1: i32, %arg2: memref<16x32xf32, #tpu.memory_space<vmem>>, %arg3: memref<32x256xf32, #tpu.memory_space<vmem>>, %arg4: memref<1x256xf32, #tpu.memory_space<vmem>>, %arg5: memref<16x256xf32, #tpu.memory_space<vmem>>) attributes {dimension_semantics = [#tpu.dimension_semantics<parallel>, #tpu.dimension_semantics<arbitrary>], iteration_bounds = array<i64: 1, 1>, scalar_prefetch = 0 : i64, scratch_operands = 0 : i64, tpu.core_type = #tpu.core_type<tc>, window_params = [{transform_indices = @transform_0, window_bounds = array<i64: 16, 32>}, {transform_indices = @transform_1, window_bounds = array<i64: 32, 256>}, {transform_indices = @transform_2, window_bounds = array<i64: 1, 256>}, {transform_indices = @transform_3, window_bounds = array<i64: 16, 256>}]} {
    %c0 = arith.constant 0 : index
    %c0_0 = arith.constant 0 : index
    %0 = vector.load %arg2[%c0, %c0_0] : memref<16x32xf32, #tpu.memory_space<vmem>>, vector<16x32xf32>
    %c0_1 = arith.constant 0 : index
    %c0_2 = arith.constant 0 : index
    %1 = vector.load %arg3[%c0_1, %c0_2] : memref<32x256xf32, #tpu.memory_space<vmem>>, vector<32x256xf32>
    %cst = arith.constant dense<0.000000e+00> : vector<16x256xf32>
    %2 = tpu.matmul %0, %1, %cst {dimension_numbers = #tpu.dot_dimension_numbers<[1], [0], [0], [1], [0, 0, 1, 1], [], []>} : vector<16x32xf32>, vector<32x256xf32>, vector<16x256xf32> -> vector<16x256xf32>
    %c0_3 = arith.constant 0 : index
    %c0_4 = arith.constant 0 : index
    %3 = vector.load %arg4[%c0_3, %c0_4] : memref<1x256xf32, #tpu.memory_space<vmem>>, vector<1x256xf32>
    %4 = vector.broadcast %3 : vector<1x256xf32> to vector<16x256xf32>
    %5 = arith.addf %2, %4 : vector<16x256xf32>
    %c0_5 = arith.constant 0 : index
    %c0_6 = arith.constant 0 : index
    %6 = vector.load %arg5[%c0_5, %c0_6] : memref<16x256xf32, #tpu.memory_space<vmem>>, vector<16x256xf32>
    tpu.vector_store %arg5[%c0_5, %c0_6], %5 {strides = array<i32>} : memref<16x256xf32, #tpu.memory_space<vmem>>, vector<16x256xf32>,
    return
  }
  func.func @transform_0(%arg0: i32, %arg1: i32) -> (i32, i32) {
    %c0_i32 = arith.constant 0 : i32
    %c0_i32_0 = arith.constant 0 : i32
    return %arg1, %c0_i32 : i32, i32
  }
  func.func @transform_1(%arg0: i32, %arg1: i32) -> (i32, i32) {
    %c0_i32 = arith.constant 0 : i32
    %c0_i32_0 = arith.constant 0 : i32
    return %c0_i32, %arg0 : i32, i32
  }
  func.func @transform_2(%arg0: i32, %arg1: i32) -> (i32, i32) {
    %c0_i32 = arith.constant 0 : i32
    %c0_i32_0 = arith.constant 0 : i32
    return %c0_i32, %arg0 : i32, i32
  }
  func.func @transform_3(%arg0: i32, %arg1: i32) -> (i32, i32) {
    %c0_i32 = arith.constant 0 : i32
    return %arg1, %arg0 : i32, i32
  }
}

</mosaic_0001>

<llo_original>
// kernel: lemma_decoder_forward.1
$region0: #{lemma_decoder_forward.1}
  #allocation0 [shape = 'u32[]', space=smem, size = 0x4, offset = 0x4, fixed_abs, tag = 'smem constant byte address 0x4 - core index']
  #allocation1 [shape = 'u32[72,128]{1,0:T(1,128)}', space=vmem, size = 0x9000, scoped, tag = 'internal scratch']
  %s0 = inlined_call_operand.hbm [shape: f32[16,32], index: 0, kind: input, shape index: {}]
  %s1 = inlined_call_operand.hbm [shape: f32[32,256], index: 1, kind: input, shape index: {}]
  %s2 = inlined_call_operand.vmem [shape: f32[1,256], index: 2, kind: input, shape index: {}]
  %s3 = inlined_call_operand.hbm [shape: f32[16,256], index: 3, kind: output, shape index: {}]
  %s4 = sld [smem:[#allocation0]]
  $region30: #{lemma_decoder_forward.1} parent=0
    _
  %s6 = ssub.s32 1, %s4
  %s7 = scalar_select 0, %s6, %s4
  $region1: #{lemma_decoder_forward.1} parent=0
    #allocation2 [shape = 'u8[8192]{0}', space=vmem, size = 0x2000, scoped, tag = 'input window, operand 0, single buffered']
    #allocation3 [shape = 's32[1]{0}', space=sflag, size = 0x4, scoped, tag = 'scoped memory for lemma_decoder_forward.1']
    #allocation4 [shape = 's32[1]{0}', space=sflag, size = 0x4, scoped, tag = 'scoped memory for lemma_decoder_forward.1']
    #allocation5 [shape = 'u8[32768]{0}', space=vmem, size = 0x8000, scoped, tag = 'input window, operand 1, single buffered']
    #allocation6 [shape = 's32[1]{0}', space=sflag, size = 0x4, scoped, tag = 'scoped memory for lemma_decoder_forward.1']
    #allocation7 [shape = 'u8[16384]{0}', space=vmem, size = 0x4000, scoped, tag = 'output window, operand 0, single buffered']
    %8 = vsyncpa [#allocation3], 0
    %9 = vsyncpa [#allocation6], 0
    %10 = vsyncpa [#allocation4], 0
    // Predicated region
    $region2: #{lemma_decoder_forward.1} parent=1 // pred_check
      _
    $region3: #{lemma_decoder_forward.1} parent=1 // pred_check_branch
      %12 = sbr.rel (0) target = $region5
    $region4: #{lemma_decoder_forward.1} parent=1 // pred_region
      %14 = vsyncadd [#allocation3], 0
      %s15 = sshll.u32 %s0, 4
      %s16 = int_to_ptr.hbm [resolvable:$true] %s15
      %s17 = sshll.u32 [#allocation2], 4
      %s18 = int_to_ptr.vmem [resolvable:$true] %s17
      %23 = dma.hbm_to_vmem [thread:$0]  %s16, 256, %s18, [#allocation3], 128, 128, 8
    $region5: #{lemma_decoder_forward.1} parent=1 // pred_fallthru
      _
    // Predicated region
    $region6: #{lemma_decoder_forward.1} parent=1 // pred_check
      _
    $region7: #{lemma_decoder_forward.1} parent=1 // pred_check_branch
      %25 = sbr.rel (0) target = $region9
    $region8: #{lemma_decoder_forward.1} parent=1 // pred_region
      %27 = vsyncadd [#allocation6], 0
      %s28 = sshll.u32 %s1, 4
      %s29 = int_to_ptr.hbm [resolvable:$true] %s28
      %s30 = sshll.u32 [#allocation5], 4
      %s31 = int_to_ptr.vmem [resolvable:$true] %s30
      %36 = dma.hbm_to_vmem [thread:$0]  %s29, 1024, %s31, [#allocation6], 256, 256, 16
    $region9: #{lemma_decoder_forward.1} parent=1 // pred_fallthru
      _
    // Predicated region
    $region10: #{lemma_decoder_forward.1} parent=1 // pred_check
      _
    $region11: #{lemma_decoder_forward.1} parent=1 // pred_check_branch
      %38 = sbr.rel (0) target = $region13
    $region12: #{lemma_decoder_forward.1} parent=1 // pred_region
      _
    $region13: #{lemma_decoder_forward.1} parent=1 // pred_fallthru
      _
    // Predicated region
    $region14: #{lemma_decoder_forward.1} parent=1 // pred_check
      _
    $region15: #{lemma_decoder_forward.1} parent=1 // pred_check_branch
      %40 = sbr.rel (0) target = $region17
    $region16: #{lemma_decoder_forward.1} parent=1 // pred_region
      %42 = dma.done [#allocation3], 256
    $region17: #{lemma_decoder_forward.1} parent=1 // pred_fallthru
      _
    // Predicated region
    $region18: #{lemma_decoder_forward.1} parent=1 // pred_check
      _
    $region19: #{lemma_decoder_forward.1} parent=1 // pred_check_branch
      %44 = sbr.rel (0) target = $region21
    $region20: #{lemma_decoder_forward.1} parent=1 // pred_region
      %46 = dma.done [#allocation6], 1024
    $region21: #{lemma_decoder_forward.1} parent=1 // pred_fallthru
      _
    %v47 = vld [vmem:[#allocation2] sm:$0xff]
    %v48 = vld [vmem:[#allocation2 + $0x8] sm:$0xff]
    %v49 = vld [vmem:[#allocation5] sm:$0xff]
    %v50 = vld [vmem:[#allocation5 + $0x8] sm:$0xff]
    %v51 = vld [vmem:[#allocation5 + $0x10] sm:$0xff]
    %v52 = vld [vmem:[#allocation5 + $0x18] sm:$0xff]
    %v53 = vld [vmem:[#allocation5 + $0x20] sm:$0xff]
    %v54 = vld [vmem:[#allocation5 + $0x28] sm:$0xff]
    %v55 = vld [vmem:[#allocation5 + $0x30] sm:$0xff]
    %v56 = vld [vmem:[#allocation5 + $0x38] sm:$0xff]
    %v57 = vld [vmem:[%s2] sm:$0x3]
    %v59 = vperm.slane %v57, 0
    %v60 = vperm.slane %v57, 1
    %vm63 = vcmask 261120
    %v65 = vsel %vm63, %v47, 0
    %v68 = vsel %vm63, %v48, 0
    %70 = vmatpush.msra.mxu0 0.0
    %71 = vmatpush.msra.mxu0 0.0
    %72 = vmatpush.msra.mxu0 0.0
    %73 = vmatpush.msra.mxu0 0.0
    %74 = vmatpush.msra.mxu0 0.0
    %75 = vmatpush.msra.mxu0 0.0
    %76 = vmatpush.msra.mxu0 0.0
    %77 = vmatpush.msra.mxu0 0.0
    %78 = vmatpush.msra.mxu0 0.0
    %79 = vmatpush.msra.mxu0 0.0
    %80 = vmatpush.msra.mxu0 0.0
    %81 = vmatpush.msra.mxu0 0.0
    %82 = vmatpush.msra.mxu0 %v55
    %83 = vmatpush.msra.mxu0 %v53
    %84 = vmatpush.msra.mxu0 %v51
    %85 = vmatpush.msra.mxu0 %v49
    %86 = vmatmul.f32.gmra.mxu0 %v65
    %v87 = vpop.f32.mrf.mxu0
    %v88 = vadd.f32 %v59, %v87
    %89 = vmatmul.f32.gmra.mxu0 %v68
    %v90 = vpop.f32.mrf.mxu0
    %v91 = vadd.f32 %v59, %v90
    %92 = vdwg.mxu0
    %93 = vmatpush.msra.mxu0 0.0
    %94 = vmatpush.msra.mxu0 0.0
    %95 = vmatpush.msra.mxu0 0.0
    %96 = vmatpush.msra.mxu0 0.0
    %97 = vmatpush.msra.mxu0 0.0
    %98 = vmatpush.msra.mxu0 0.0
    %99 = vmatpush.msra.mxu0 0.0
    %100 = vmatpush.msra.mxu0 0.0
    %101 = vmatpush.msra.mxu0 0.0
    %102 = vmatpush.msra.mxu0 0.0
    %103 = vmatpush.msra.mxu0 0.0
    %104 = vmatpush.msra.mxu0 0.0
    %105 = vmatpush.msra.mxu0 %v56
    %106 = vmatpush.msra.mxu0 %v54
    %107 = vmatpush.msra.mxu0 %v52
    %108 = vmatpush.msra.mxu0 %v50
    %109 = vmatmul.f32.gmra.mxu0 %v65
    %v110 = vpop.f32.mrf.mxu0
    %v111 = vadd.f32 %v60, %v110
    %112 = vmatmul.f32.gmra.mxu0 %v68
    %v113 = vpop.f32.mrf.mxu0
    %v114 = vadd.f32 %v60, %v113
    %115 = vdwg.mxu0
    %116 = vst [vmem:[#allocation7] sm:$0xff] %v88
    %117 = vst [vmem:[#allocation7 + $0x8] sm:$0xff] %v111
    %118 = vst [vmem:[#allocation7 + $0x10] sm:$0xff] %v91
    %119 = vst [vmem:[#allocation7 + $0x18] sm:$0xff] %v114
    // Predicated region
    $region22: #{lemma_decoder_forward.1} parent=1 // pred_check
      _
    $region23: #{lemma_decoder_forward.1} parent=1 // pred_check_branch
      %121 = sbr.rel (0) target = $region25
    $region24: #{lemma_decoder_forward.1} parent=1 // pred_region
      %123 = vsyncadd [#allocation4], 0
      %s124 = sshll.u32 [#allocation7], 4
      %s125 = int_to_ptr.vmem [resolvable:$true] %s124
      %s126 = sshll.u32 %s3, 4
      %s127 = int_to_ptr.hbm [resolvable:$true] %s126
      %132 = dma.vmem_to_hbm [thread:$0]  %s125, 512, %s127, [#allocation4], 256, 256, 16
    $region25: #{lemma_decoder_forward.1} parent=1 // pred_fallthru
      _
    // Predicated region
    $region26: #{lemma_decoder_forward.1} parent=1 // pred_check
      _
    $region27: #{lemma_decoder_forward.1} parent=1 // pred_check_branch
      %134 = sbr.rel (0) target = $region29
    $region28: #{lemma_decoder_forward.1} parent=1 // pred_region
      %136 = dma.done [#allocation4], 512
    $region29: #{lemma_decoder_forward.1} parent=1 // pred_fallthru
      _
    %137 = vsyncpa [#allocation3], 1
    %138 = vsyncpa [#allocation6], 1
    %139 = vsyncpa [#allocation4], 1

</llo_original>
